<compile_context>
chip_gen: v5e
topology: v5e:2x2
jax: 0.10.0
libtpu: 0.0.40
codegen_flags: <defaults>
</compile_context>

<pallas_src>
import functools

import jax
import jax.numpy as jnp
from jax.experimental import pallas as pl
from jax.experimental.pallas import tpu as pltpu

LANE = 128  # vreg lane width


def _round_up(n, m):
    return ((n + m - 1) // m) * m


def _pad2d(a, rows, cols):
    r, c = a.shape
    return jnp.pad(a, ((0, rows - r), (0, cols - c)))


def deep_nn_kernel(x_ref, w1_ref, b1_ref, w2_ref, b2_ref, w3_ref, b3_ref, out_ref):
    # One batch tile (TB, in_dim); all weights/biases resident in VMEM across
    # the whole batch grid (index_map -> (0, 0)).
    x = x_ref[...]

    h = jnp.dot(x, w1_ref[...], preferred_element_type=jnp.float32) + b1_ref[...]
    h = jnp.maximum(h, 0.0)

    h = jnp.dot(h, w2_ref[...], preferred_element_type=jnp.float32) + b2_ref[...]
    h = jnp.maximum(h, 0.0)

    h = jnp.dot(h, w3_ref[...], preferred_element_type=jnp.float32) + b3_ref[...]
    out_ref[...] = h.astype(out_ref.dtype)


def prepare_params(params):
    """Pad hidden dims to 128 lanes ONCE (hoisted out of the forward path)."""
    w1, b1, w2, b2, w3, b3 = params
    in_dim, hid = w1.shape
    out_dim = w3.shape[1]
    hid_p = _round_up(hid, LANE)

    w1_p = _pad2d(w1, in_dim, hid_p)                 # (20, 128)  - K stays logical
    b1_p = _pad2d(b1.reshape(1, -1), 1, hid_p)       # (1, 128)
    w2_p = _pad2d(w2, hid_p, hid_p)                  # (128, 128)
    b2_p = _pad2d(b2.reshape(1, -1), 1, hid_p)       # (1, 128)
    w3_p = _pad2d(w3, hid_p, out_dim)                # (128, 3)   - N stays logical
    b3_p = b3.reshape(1, -1)                         # (1, 3)
    return (w1_p, b1_p, w2_p, b2_p, w3_p, b3_p)


def _pick_tb(batch):
    if batch <= 16:
        return _round_up(max(batch, 1), 8)
    if batch < 1024:
        # At least two grid steps so v7x's 2nd TensorCore has work to shard.
        return _round_up((batch + 1) // 2, 8)
    # Large batch: big tile amortizes per-grid-step overhead; activation tiles
    # (TB*20 in, TB*3 out, f32, double-buffered) stay tiny even on v5e.
    return 512


@functools.partial(jax.jit, static_argnames=("tb",))
def deep_nn_forward(x, padded_params, tb=None):
    """Forward pass: x (batch, in_dim) f32 -> logits (batch, out_dim) f32.

    `padded_params` must come from prepare_params().
    """
    w1_p, b1_p, w2_p, b2_p, w3_p, b3_p = padded_params
    batch, in_dim = x.shape
    hid_p = w1_p.shape[1]
    out_dim = w3_p.shape[1]

    if tb is None:
        tb = _pick_tb(batch)
    tb = _round_up(int(tb), 8)          # (8,128) sublane constraint
    batch_p = _round_up(batch, tb)

    # Only the batch dim of x is padded; last dim stays at its logical width
    # so each activation block is a single contiguous full-row DMA.
    x_p = jnp.pad(x, ((0, batch_p - batch), (0, 0))) if batch_p != batch else x

    grid = (batch_p // tb,)

    # Activations: tiled over batch, full (logical) last dim.
    act_in_spec = pl.BlockSpec((tb, in_dim), lambda i: (i, 0))
    act_out_spec = pl.BlockSpec((tb, out_dim), lambda i: (i, 0))
    # Weights / biases resident across the batch grid.
    w1_spec = pl.BlockSpec((in_dim, hid_p), lambda i: (0, 0))
    b1_spec = pl.BlockSpec((1, hid_p), lambda i: (0, 0))
    w2_spec = pl.BlockSpec((hid_p, hid_p), lambda i: (0, 0))
    b2_spec = pl.BlockSpec((1, hid_p), lambda i: (0, 0))
    w3_spec = pl.BlockSpec((hid_p, out_dim), lambda i: (0, 0))
    b3_spec = pl.BlockSpec((1, out_dim), lambda i: (0, 0))

    # Advisory cost hint (logical flops / bytes) for the XLA scheduler.
    param_bytes = sum(int(p.size) * 4 for p in padded_params)
    flops = 2 * batch_p * (in_dim * hid_p + hid_p * hid_p + hid_p * out_dim)
    bytes_accessed = batch_p * (in_dim + out_dim) * 4 + param_bytes
    cost = pl.CostEstimate(flops=flops, transcendentals=0,
                           bytes_accessed=bytes_accessed)

    out = pl.pallas_call(
        deep_nn_kernel,
        out_shape=jax.ShapeDtypeStruct((batch_p, out_dim), jnp.float32),
        grid=grid,
        in_specs=[act_in_spec, w1_spec, b1_spec, w2_spec, b2_spec,
                  w3_spec, b3_spec],
        out_specs=act_out_spec,
        compiler_params=pltpu.CompilerParams(
            dimension_semantics=("parallel",),
        ),
        cost_estimate=cost,
    )(x_p, w1_p, b1_p, w2_p, b2_p, w3_p, b3_p)

    return out[:batch] if batch_p != batch else out


def init_params(key, input_size, hidden_size, output_size):
    """Deterministic synthetic params (PyTorch-style uniform fan-in init)."""
    ks = jax.random.split(key, 6)

    def uniform(k, shape, fan_in):
        bound = 1.0 / jnp.sqrt(fan_in)
        return jax.random.uniform(k, shape, jnp.float32, -bound, bound)

    w1 = uniform(ks[0], (input_size, hidden_size), input_size)
    b1 = uniform(ks[1], (hidden_size,), input_size)
    w2 = uniform(ks[2], (hidden_size, hidden_size), hidden_size)
    b2 = uniform(ks[3], (hidden_size,), hidden_size)
    w3 = uniform(ks[4], (hidden_size, output_size), hidden_size)
    b3 = uniform(ks[5], (output_size,), hidden_size)
    return (w1, b1, w2, b2, w3, b3)


def reference_forward(x, params):
    w1, b1, w2, b2, w3, b3 = params
    h = jnp.maximum(x @ w1 + b1, 0.0)
    h = jnp.maximum(h @ w2 + b2, 0.0)
    return h @ w3 + b3


if __name__ == "__main__":
    input_size = 20    # n_features
    hidden_size = 64
    output_size = 3    # n_classes
    batch = 8

    key = jax.random.PRNGKey(0)
    k_x, k_p = jax.random.split(key)

    x = jax.random.normal(k_x, (batch, input_size), dtype=jnp.float32)
    params = init_params(k_p, input_size, hidden_size, output_size)

    # Pad weights once, outside the hot path.
    padded_params = jax.tree_util.tree_map(
        jax.block_until_ready, prepare_params(params))

    out = deep_nn_forward(x, padded_params)
    out = jax.block_until_ready(out)

    ref = reference_forward(x, params)
    assert out.shape == (batch, output_size)
    assert jnp.allclose(out, ref, atol=1e-5, rtol=1e-5)

    # Also exercise a larger, multi-tile batch (2 grid steps at this size).
    big_batch = 300
    xb = jax.random.normal(jax.random.PRNGKey(1), (big_batch, input_size),
                           dtype=jnp.float32)
    out_b = jax.block_until_ready(deep_nn_forward(xb, padded_params))
    ref_b = reference_forward(xb, params)
    assert out_b.shape == (big_batch, output_size)
    assert jnp.allclose(out_b, ref_b, atol=1e-4, rtol=1e-4)

    print("KERNEL_OK")
</pallas_src>

<mosaic_0001>
module attributes {stable_mosaic.version = 11 : i64} {
  func.func @deep_nn_kernel(%arg0: i32, %arg1: memref<8x20xf32, #tpu.memory_space<vmem>>, %arg2: memref<20x128xf32, #tpu.memory_space<vmem>>, %arg3: memref<1x128xf32, #tpu.memory_space<vmem>>, %arg4: memref<128x128xf32, #tpu.memory_space<vmem>>, %arg5: memref<1x128xf32, #tpu.memory_space<vmem>>, %arg6: memref<128x3xf32, #tpu.memory_space<vmem>>, %arg7: memref<1x3xf32, #tpu.memory_space<vmem>>, %arg8: memref<8x3xf32, #tpu.memory_space<vmem>>) attributes {dimension_semantics = [#tpu.dimension_semantics<parallel>], iteration_bounds = array<i64: 1>, scalar_prefetch = 0 : i64, scratch_operands = 0 : i64, tpu.core_type = #tpu.core_type<tc>, window_params = [{transform_indices = @transform_0, window_bounds = array<i64: 8, 20>}, {pipeline_mode = #tpu.pipeline_mode<synchronous>, transform_indices = @transform_1, window_bounds = array<i64: 20, 128>}, {pipeline_mode = #tpu.pipeline_mode<synchronous>, transform_indices = @transform_2, window_bounds = array<i64: 1, 128>}, {pipeline_mode = #tpu.pipeline_mode<synchronous>, transform_indices = @transform_3, window_bounds = array<i64: 128, 128>}, {pipeline_mode = #tpu.pipeline_mode<synchronous>, transform_indices = @transform_4, window_bounds = array<i64: 1, 128>}, {pipeline_mode = #tpu.pipeline_mode<synchronous>, transform_indices = @transform_5, window_bounds = array<i64: 128, 3>}, {pipeline_mode = #tpu.pipeline_mode<synchronous>, transform_indices = @transform_6, window_bounds = array<i64: 1, 3>}, {transform_indices = @transform_7, window_bounds = array<i64: 8, 3>}]} {
    %c0 = arith.constant 0 : index
    %c0_0 = arith.constant 0 : index
    %0 = vector.load %arg1[%c0, %c0_0] : memref<8x20xf32, #tpu.memory_space<vmem>>, vector<8x20xf32>
    %c0_1 = arith.constant 0 : index
    %c0_2 = arith.constant 0 : index
    %1 = vector.load %arg2[%c0_1, %c0_2] : memref<20x128xf32, #tpu.memory_space<vmem>>, vector<20x128xf32>
    %cst = arith.constant dense<0.000000e+00> : vector<8x128xf32>
    %2 = tpu.matmul %0, %1, %cst {dimension_numbers = #tpu.dot_dimension_numbers<[1], [0], [0], [1], [0, 0, 1, 1], [], []>} : vector<8x20xf32>, vector<20x128xf32>, vector<8x128xf32> -> vector<8x128xf32>
    %c0_3 = arith.constant 0 : index
    %c0_4 = arith.constant 0 : index
    %3 = vector.load %arg3[%c0_3, %c0_4] : memref<1x128xf32, #tpu.memory_space<vmem>>, vector<1x128xf32>
    %4 = vector.broadcast %3 : vector<1x128xf32> to vector<8x128xf32>
    %5 = arith.addf %2, %4 : vector<8x128xf32>
    %cst_5 = arith.constant 0.000000e+00 : f32
    %6 = vector.broadcast %cst_5 : f32 to vector<8x128xf32>
    %7 = arith.maximumf %5, %6 : vector<8x128xf32>
    %c0_6 = arith.constant 0 : index
    %c0_7 = arith.constant 0 : index
    %8 = vector.load %arg4[%c0_6, %c0_7] : memref<128x128xf32, #tpu.memory_space<vmem>>, vector<128x128xf32>
    %cst_8 = arith.constant dense<0.000000e+00> : vector<8x128xf32>
    %9 = tpu.matmul %7, %8, %cst_8 {dimension_numbers = #tpu.dot_dimension_numbers<[1], [0], [0], [1], [0, 0, 1, 1], [], []>} : vector<8x128xf32>, vector<128x128xf32>, vector<8x128xf32> -> vector<8x128xf32>
    %c0_9 = arith.constant 0 : index
    %c0_10 = arith.constant 0 : index
    %10 = vector.load %arg5[%c0_9, %c0_10] : memref<1x128xf32, #tpu.memory_space<vmem>>, vector<1x128xf32>
    %11 = vector.broadcast %10 : vector<1x128xf32> to vector<8x128xf32>
    %12 = arith.addf %9, %11 : vector<8x128xf32>
    %cst_11 = arith.constant 0.000000e+00 : f32
    %13 = vector.broadcast %cst_11 : f32 to vector<8x128xf32>
    %14 = arith.maximumf %12, %13 : vector<8x128xf32>
    %c0_12 = arith.constant 0 : index
    %c0_13 = arith.constant 0 : index
    %15 = vector.load %arg6[%c0_12, %c0_13] : memref<128x3xf32, #tpu.memory_space<vmem>>, vector<128x3xf32>
    %cst_14 = arith.constant dense<0.000000e+00> : vector<8x3xf32>
    %16 = tpu.matmul %14, %15, %cst_14 {dimension_numbers = #tpu.dot_dimension_numbers<[1], [0], [0], [1], [0, 0, 1, 1], [], []>} : vector<8x128xf32>, vector<128x3xf32>, vector<8x3xf32> -> vector<8x3xf32>
    %c0_15 = arith.constant 0 : index
    %c0_16 = arith.constant 0 : index
    %17 = vector.load %arg7[%c0_15, %c0_16] : memref<1x3xf32, #tpu.memory_space<vmem>>, vector<1x3xf32>
    %18 = vector.broadcast %17 : vector<1x3xf32> to vector<8x3xf32>
    %19 = arith.addf %16, %18 : vector<8x3xf32>
    %c0_17 = arith.constant 0 : index
    %c0_18 = arith.constant 0 : index
    %20 = vector.load %arg8[%c0_17, %c0_18] : memref<8x3xf32, #tpu.memory_space<vmem>>, vector<8x3xf32>
    tpu.vector_store %arg8[%c0_17, %c0_18], %19 {strides = array<i32>} : memref<8x3xf32, #tpu.memory_space<vmem>>, vector<8x3xf32>,
    return
  }
  func.func @transform_0(%arg0: i32) -> (i32, i32) {
    %c0_i32 = arith.constant 0 : i32
    %c0_i32_0 = arith.constant 0 : i32
    return %arg0, %c0_i32 : i32, i32
  }
  func.func @transform_1(%arg0: i32) -> (i32, i32) {
    %c0_i32 = arith.constant 0 : i32
    %c0_i32_0 = arith.constant 0 : i32
    %c0_i32_1 = arith.constant 0 : i32
    return %c0_i32, %c0_i32_0 : i32, i32
  }
  func.func @transform_2(%arg0: i32) -> (i32, i32) {
    %c0_i32 = arith.constant 0 : i32
    %c0_i32_0 = arith.constant 0 : i32
    %c0_i32_1 = arith.constant 0 : i32
    return %c0_i32, %c0_i32_0 : i32, i32
  }
  func.func @transform_3(%arg0: i32) -> (i32, i32) {
    %c0_i32 = arith.constant 0 : i32
    %c0_i32_0 = arith.constant 0 : i32
    %c0_i32_1 = arith.constant 0 : i32
    return %c0_i32, %c0_i32_0 : i32, i32
  }
  func.func @transform_4(%arg0: i32) -> (i32, i32) {
    %c0_i32 = arith.constant 0 : i32
    %c0_i32_0 = arith.constant 0 : i32
    %c0_i32_1 = arith.constant 0 : i32
    return %c0_i32, %c0_i32_0 : i32, i32
  }
  func.func @transform_5(%arg0: i32) -> (i32, i32) {
    %c0_i32 = arith.constant 0 : i32
    %c0_i32_0 = arith.constant 0 : i32
    %c0_i32_1 = arith.constant 0 : i32
    return %c0_i32, %c0_i32_0 : i32, i32
  }
  func.func @transform_6(%arg0: i32) -> (i32, i32) {
    %c0_i32 = arith.constant 0 : i32
    %c0_i32_0 = arith.constant 0 : i32
    %c0_i32_1 = arith.constant 0 : i32
    return %c0_i32, %c0_i32_0 : i32, i32
  }
  func.func @transform_7(%arg0: i32) -> (i32, i32) {
    %c0_i32 = arith.constant 0 : i32
    %c0_i32_0 = arith.constant 0 : i32
    return %arg0, %c0_i32 : i32, i32
  }
}

</mosaic_0001>

<llo_original>
// kernel: deep_nn_forward.1
$region0: #{deep_nn_forward.1}
  #allocation0 [shape = 'u32[]', space=smem, size = 0x4, offset = 0x4, fixed_abs, tag = 'smem constant byte address 0x4 - core index']
  #allocation1 [shape = 'u32[72,128]{1,0:T(1,128)}', space=vmem, size = 0x9000, scoped, tag = 'internal scratch']
  %s0 = inlined_call_operand.hbm [shape: f32[8,20], index: 0, kind: input, shape index: {}]
  %s1 = inlined_call_operand.hbm [shape: f32[20,128], index: 1, kind: input, shape index: {}]
  %s2 = inlined_call_operand.vmem [shape: f32[1,128], index: 2, kind: input, shape index: {}]
  %s3 = inlined_call_operand.vmem [shape: f32[128,128], index: 3, kind: input, shape index: {}]
  %s4 = inlined_call_operand.vmem [shape: f32[1,128], index: 4, kind: input, shape index: {}]
  %s5 = inlined_call_operand.vmem [shape: f32[128,3], index: 5, kind: input, shape index: {}]
  %s6 = inlined_call_operand.vmem [shape: f32[1,3], index: 6, kind: input, shape index: {}]
  %s7 = inlined_call_operand.vmem [shape: f32[8,3], index: 7, kind: output, shape index: {}]
  %s8 = sld [smem:[#allocation0]]
  $region46: #{deep_nn_forward.1} parent=0
    _
  %s10 = ssub.s32 1, %s8
  %s11 = scalar_select 0, %s10, %s8
  $region1: #{deep_nn_forward.1} parent=0
    #allocation2 [shape = 'u8[4096]{0}', space=vmem, size = 0x1000, scoped, tag = 'input window, operand 0, single buffered']
    #allocation3 [shape = 's32[1]{0}', space=sflag, size = 0x4, scoped, tag = 'scoped memory for deep_nn_forward.1']
    #allocation4 [shape = 'u8[12288]{0}', space=vmem, size = 0x3000, scoped, tag = 'input window, operand 1, single buffered']
    #allocation5 [shape = 's32[1]{0}', space=sflag, size = 0x4, scoped, tag = 'scoped memory for deep_nn_forward.1']
    %12 = vsyncpa [#allocation3], 0
    %13 = vsyncpa [#allocation5], 0
    // Predicated region
    $region2: #{deep_nn_forward.1} parent=1 // pred_check
      _
    $region3: #{deep_nn_forward.1} parent=1 // pred_check_branch
      %15 = sbr.rel (0) target = $region5
    $region4: #{deep_nn_forward.1} parent=1 // pred_region
      %17 = vsyncadd [#allocation3], 0
      %s19 = sshll.u32 %s0, 4
      %s20 = int_to_ptr.hbm [resolvable:$true] %s19
      %s21 = sshll.u32 [#allocation2], 4
      %s22 = int_to_ptr.vmem [resolvable:$true] %s21
      %24 = dma.hbm_to_vmem [thread:$0]  %s20, 128, %s22, [#allocation3]
    $region5: #{deep_nn_forward.1} parent=1 // pred_fallthru
      _
    // Predicated region
    $region6: #{deep_nn_forward.1} parent=1 // pred_check
      _
    $region7: #{deep_nn_forward.1} parent=1 // pred_check_branch
      %26 = sbr.rel (0) target = $region9
    $region8: #{deep_nn_forward.1} parent=1 // pred_region
      %28 = vsyncadd [#allocation5], 0
      %s29 = sshll.u32 %s1, 4
      %s30 = int_to_ptr.hbm [resolvable:$true] %s29
      %s31 = sshll.u32 [#allocation4], 4
      %s32 = int_to_ptr.vmem [resolvable:$true] %s31
      %37 = dma.hbm_to_vmem [thread:$0]  %s30, 384, %s32, [#allocation5], 128, 128, 8
    $region9: #{deep_nn_forward.1} parent=1 // pred_fallthru
      _
    // Predicated region
    $region10: #{deep_nn_forward.1} parent=1 // pred_check
      _
    $region11: #{deep_nn_forward.1} parent=1 // pred_check_branch
      %39 = sbr.rel (0) target = $region13
    $region12: #{deep_nn_forward.1} parent=1 // pred_region
      _
    $region13: #{deep_nn_forward.1} parent=1 // pred_fallthru
      _
    // Predicated region
    $region14: #{deep_nn_forward.1} parent=1 // pred_check
      _
    $region15: #{deep_nn_forward.1} parent=1 // pred_check_branch
      %41 = sbr.rel (0) target = $region17
    $region16: #{deep_nn_forward.1} parent=1 // pred_region
      _
    $region17: #{deep_nn_forward.1} parent=1 // pred_fallthru
      _
    // Predicated region
    $region18: #{deep_nn_forward.1} parent=1 // pred_check
      _
    $region19: #{deep_nn_forward.1} parent=1 // pred_check_branch
      %43 = sbr.rel (0) target = $region21
    $region20: #{deep_nn_forward.1} parent=1 // pred_region
      _
    $region21: #{deep_nn_forward.1} parent=1 // pred_fallthru
      _
    // Predicated region
    $region22: #{deep_nn_forward.1} parent=1 // pred_check
      _
    $region23: #{deep_nn_forward.1} parent=1 // pred_check_branch
      %45 = sbr.rel (0) target = $region25
    $region24: #{deep_nn_forward.1} parent=1 // pred_region
      _
    $region25: #{deep_nn_forward.1} parent=1 // pred_fallthru
      _
    // Predicated region
    $region26: #{deep_nn_forward.1} parent=1 // pred_check
      _
    $region27: #{deep_nn_forward.1} parent=1 // pred_check_branch
      %47 = sbr.rel (0) target = $region29
    $region28: #{deep_nn_forward.1} parent=1 // pred_region
      _
    $region29: #{deep_nn_forward.1} parent=1 // pred_fallthru
      _
    // Predicated region
    $region30: #{deep_nn_forward.1} parent=1 // pred_check
      _
    $region31: #{deep_nn_forward.1} parent=1 // pred_check_branch
      %49 = sbr.rel (0) target = $region33
    $region32: #{deep_nn_forward.1} parent=1 // pred_region
      %51 = dma.done [#allocation3], 128
    $region33: #{deep_nn_forward.1} parent=1 // pred_fallthru
      _
    // Predicated region
    $region34: #{deep_nn_forward.1} parent=1 // pred_check
      _
    $region35: #{deep_nn_forward.1} parent=1 // pred_check_branch
      %53 = sbr.rel (0) target = $region37
    $region36: #{deep_nn_forward.1} parent=1 // pred_region
      %55 = dma.done [#allocation5], 384
    $region37: #{deep_nn_forward.1} parent=1 // pred_fallthru
      _
    %v56 = vld [vmem:[#allocation2] sm:$0xff]
    %v57 = vld [vmem:[#allocation4] sm:$0xff]
    %v58 = vld [vmem:[#allocation4 + $0x8] sm:$0xff]
    %v59 = vld [vmem:[#allocation4 + $0x10] sm:$0xf]
    %v60 = vld [vmem:[%s2] sm:$0x1]
    %v62 = vperm.slane %v60, 0
    %vm64 = vcmask 162816
    %v66 = vsel %vm64, %v56, 0
    %vm68 = vcmask 1043456
    %v70 = vsel %vm68, %v59, 0
    %72 = vmatpush.msra.mxu0 0.0
    %73 = vmatpush.msra.mxu0 0.0
    %74 = vmatpush.msra.mxu0 0.0
    %75 = vmatpush.msra.mxu0 0.0
    %76 = vmatpush.msra.mxu0 0.0
    %77 = vmatpush.msra.mxu0 0.0
    %78 = vmatpush.msra.mxu0 0.0
    %79 = vmatpush.msra.mxu0 0.0
    %80 = vmatpush.msra.mxu0 0.0
    %81 = vmatpush.msra.mxu0 0.0
    %82 = vmatpush.msra.mxu0 0.0
    %83 = vmatpush.msra.mxu0 0.0
    %84 = vmatpush.msra.mxu0 0.0
    %85 = vmatpush.msra.mxu0 %v70
    %86 = vmatpush.msra.mxu0 %v58
    %87 = vmatpush.msra.mxu0 %v57
    %88 = vmatmul.f32.gmra.mxu0 %v66
    %v89 = vpop.f32.mrf.mxu0
    %v90 = vadd.f32 %v62, %v89
    %91 = vdwg.mxu0
    %v92 = vmax.f32 %v90, 0.0
    %v93 = vld [vmem:[%s3] sm:$0xff]
    %v94 = vld [vmem:[%s3 + $0x8] sm:$0xff]
    %v95 = vld [vmem:[%s3 + $0x10] sm:$0xff]
    %v96 = vld [vmem:[%s3 + $0x18] sm:$0xff]
    %v97 = vld [vmem:[%s3 + $0x20] sm:$0xff]
    %v98 = vld [vmem:[%s3 + $0x28] sm:$0xff]
    %v99 = vld [vmem:[%s3 + $0x30] sm:$0xff]
    %v100 = vld [vmem:[%s3 + $0x38] sm:$0xff]
    %v101 = vld [vmem:[%s3 + $0x40] sm:$0xff]
    %v102 = vld [vmem:[%s3 + $0x48] sm:$0xff]
    %v103 = vld [vmem:[%s3 + $0x50] sm:$0xff]
    %v104 = vld [vmem:[%s3 + $0x58] sm:$0xff]
    %v105 = vld [vmem:[%s3 + $0x60] sm:$0xff]
    %v106 = vld [vmem:[%s3 + $0x68] sm:$0xff]
    %v107 = vld [vmem:[%s3 + $0x70] sm:$0xff]
    %v108 = vld [vmem:[%s3 + $0x78] sm:$0xff]
    %v109 = vld [vmem:[%s4] sm:$0x1]
    %v111 = vperm.slane %v109, 0
    %113 = vmatpush.msra.mxu0 %v108
    %114 = vmatpush.msra.mxu0 %v107
    %115 = vmatpush.msra.mxu0 %v106
    %116 = vmatpush.msra.mxu0 %v105
    %117 = vmatpush.msra.mxu0 %v104
    %118 = vmatpush.msra.mxu0 %v103
    %119 = vmatpush.msra.mxu0 %v102
    %120 = vmatpush.msra.mxu0 %v101
    %121 = vmatpush.msra.mxu0 %v100
    %122 = vmatpush.msra.mxu0 %v99
    %123 = vmatpush.msra.mxu0 %v98
    %124 = vmatpush.msra.mxu0 %v97
    %125 = vmatpush.msra.mxu0 %v96
    %126 = vmatpush.msra.mxu0 %v95
    %127 = vmatpush.msra.mxu0 %v94
    %128 = vmatpush.msra.mxu0 %v93
    %129 = vmatmul.f32.gmra.mxu0 %v92
    %v130 = vpop.f32.mrf.mxu0
    %v131 = vadd.f32 %v111, %v130
    %132 = vdwg.mxu0
    %v133 = vmax.f32 %v131, 0.0
    %v134 = vld [vmem:[%s5] sm:$0xff]
    %v135 = vld [vmem:[%s5 + $0x8] sm:$0xff]
    %v136 = vld [vmem:[%s5 + $0x10] sm:$0xff]
    %v137 = vld [vmem:[%s5 + $0x18] sm:$0xff]
    %v138 = vld [vmem:[%s5 + $0x20] sm:$0xff]
    %v139 = vld [vmem:[%s5 + $0x28] sm:$0xff]
    %v140 = vld [vmem:[%s5 + $0x30] sm:$0xff]
    %v141 = vld [vmem:[%s5 + $0x38] sm:$0xff]
    %v142 = vld [vmem:[%s5 + $0x40] sm:$0xff]
    %v143 = vld [vmem:[%s5 + $0x48] sm:$0xff]
    %v144 = vld [vmem:[%s5 + $0x50] sm:$0xff]
    %v145 = vld [vmem:[%s5 + $0x58] sm:$0xff]
    %v146 = vld [vmem:[%s5 + $0x60] sm:$0xff]
    %v147 = vld [vmem:[%s5 + $0x68] sm:$0xff]
    %v148 = vld [vmem:[%s5 + $0x70] sm:$0xff]
    %v149 = vld [vmem:[%s5 + $0x78] sm:$0xff]
    %v150 = vld [vmem:[%s6] sm:$0x1]
    %v152 = vperm.slane %v150, 0
    %154 = vmatpush.msra.mxu0 %v149
    %155 = vmatpush.msra.mxu0 %v148
    %156 = vmatpush.msra.mxu0 %v147
    %157 = vmatpush.msra.mxu0 %v146
    %158 = vmatpush.msra.mxu0 %v145
    %159 = vmatpush.msra.mxu0 %v144
    %160 = vmatpush.msra.mxu0 %v143
    %161 = vmatpush.msra.mxu0 %v142
    %162 = vmatpush.msra.mxu0 %v141
    %163 = vmatpush.msra.mxu0 %v140
    %164 = vmatpush.msra.mxu0 %v139
    %165 = vmatpush.msra.mxu0 %v138
    %166 = vmatpush.msra.mxu0 %v137
    %167 = vmatpush.msra.mxu0 %v136
    %168 = vmatpush.msra.mxu0 %v135
    %169 = vmatpush.msra.mxu0 %v134
    %170 = vmatmul.f32.gmra.mxu0 %v133
    %v171 = vpop.f32.mrf.mxu0
    %v172 = vadd.f32 %v152, %v171
    %173 = vdwg.mxu0
    %vm174 = vcmask 23552
    %175 = vst.msk [vmem:[%s7] sm:$0xff] %vm174, %v172
    // Predicated region
    $region38: #{deep_nn_forward.1} parent=1 // pred_check
      _
    $region39: #{deep_nn_forward.1} parent=1 // pred_check_branch
      %177 = sbr.rel (0) target = $region41
    $region40: #{deep_nn_forward.1} parent=1 // pred_region
      _
    $region41: #{deep_nn_forward.1} parent=1 // pred_fallthru
      _
    // Predicated region
    $region42: #{deep_nn_forward.1} parent=1 // pred_check
      _
    $region43: #{deep_nn_forward.1} parent=1 // pred_check_branch
      %179 = sbr.rel (0) target = $region45
    $region44: #{deep_nn_forward.1} parent=1 // pred_region
      _
    $region45: #{deep_nn_forward.1} parent=1 // pred_fallthru
      _
    %180 = vsyncpa [#allocation3], 1
    %181 = vsyncpa [#allocation5], 1

</llo_original>
